<compile_context>
chip_gen: v7x
topology: tpu7x:2x2x1
jax: 0.10.0
libtpu: 0.0.40
codegen_flags: <defaults>
</compile_context>

<pallas_src>
import functools

import jax
import jax.numpy as jnp
from jax.experimental import pallas as pl
from jax.experimental.pallas import tpu as pltpu


# ----------------------------------------------------------------------------
# Hardware-generation budget (VMEM size used as a proxy for the part).
# ----------------------------------------------------------------------------
def _tpu_budget():
    """Returns (target_tile_bytes, vmem_cap_bytes, two_tensorcores)."""
    phys_vmem = None
    try:
        phys_vmem = int(pltpu.get_tpu_info().vmem_capacity_bytes)
    except Exception:
        phys_vmem = None
    if phys_vmem is None:
        phys_vmem = 64 << 20  # conservative default: assume v7x-like
    if phys_vmem <= (96 << 20):
        # v7x-like: 64 MiB VMEM per TC, 2 TCs per chip.  Leave the compiler
        # headroom: cap the request well under physical VMEM.
        return (4 << 20), (48 << 20), True
    # v5e / v6e: 128 MiB VMEM, single TensorCore.  Bigger tiles amortize the
    # ~0.35 us per-grid-step overhead further at zero risk.
    return (8 << 20), (96 << 20), False


def _fused_vmem_estimate(rows, hw, itemsize):
    """Honest per-step VMEM accounting for the fused (single-pass) kernel."""
    tile = rows * hw * itemsize      # one x tile (== one out tile)
    tile_f32 = rows * hw * 4         # in-kernel f32 working tile
    wb = 2 * 2 * rows * 512          # w & b blocks, double-buffered, lane-padded
    # double-buffered x + out tiles, ~2 f32 working tiles (upcast + square /
    # finalize product), w/b blocks, plus compiler headroom.
    return 2 * tile + 2 * tile + 2 * tile_f32 + wb + (2 << 20)


def _choose_block_rows(bc, hw, itemsize, sublane, target_tile_bytes, vmem_cap,
                       two_tc):
    """Row-tile size for the fused path."""
    row_bytes = hw * itemsize
    if bc <= sublane:
        return bc  # full-extent block on the row dim (always legal)
    max_rows = (bc // sublane) * sublane
    rows = (target_tile_bytes // max(1, row_bytes)) // sublane * sublane
    rows = max(sublane, min(rows, max_rows))
    # Shrink until the honest VMEM estimate fits under the requested limit.
    while rows > sublane and _fused_vmem_estimate(rows, hw, itemsize) > vmem_cap:
        rows = max(sublane, (rows // 2) // sublane * sublane)
    # Keep enough grid steps for pipelining (and megacore sharding on 2-TC
    # parts) as long as tiles stay reasonably large.  Single-TC parts gain
    # nothing from many steps, so only ask for a few.
    min_steps = 8 if two_tc else 4
    min_tile = (1 << 20) if two_tc else (2 << 20)
    while (pl.cdiv(bc, rows) < min_steps and rows > sublane
           and (rows // 2) * row_bytes >= min_tile):
        rows = max(sublane, (rows // 2) // sublane * sublane)
    # 2-TC parts: prefer an even number of grid steps (load balance across
    # TensorCores with dimension_semantics=("parallel",)).
    if two_tc:
        nb = pl.cdiv(bc, rows)
        if nb > 1 and nb % 2 == 1:
            rows_even = pl.cdiv(pl.cdiv(bc, nb + 1), sublane) * sublane
            rows_even = max(sublane, min(rows_even, max_rows))
            if pl.cdiv(bc, rows_even) % 2 == 0:
                rows = rows_even
    return rows


# ----------------------------------------------------------------------------
# Fused kernel: whole H*W row in one block, single grid axis over rows.
# ----------------------------------------------------------------------------
def _adain_fused_kernel(x_ref, w_ref, b_ref, o_ref, *, eps, inv_hw):
    # Single pass: accumulate sum and sum-of-squares in f32 (no materialized
    # `centered` temporary); var = E[x^2] - mean^2, clamped at 0.
    xf = x_ref[...].astype(jnp.float32)
    s = jnp.sum(xf, axis=-1, keepdims=True)
    ss = jnp.sum(xf * xf, axis=-1, keepdims=True)
    mean = s * jnp.float32(inv_hw)
    var = jnp.maximum(ss * jnp.float32(inv_hw) - mean * mean, 0.0)
    inv_std = jax.lax.rsqrt(var + jnp.float32(eps))
    # Fold normalization + affine into a per-row scale/shift.
    scale = inv_std * w_ref[...]
    shift = b_ref[...] - mean * scale
    # Re-read x for the finalize (same VMEM buffer, no extra HBM traffic) so
    # the f32 upcast used for the reduction is not forced to stay live.
    # Note: garbage rows of a partial last row-block may produce inf/NaN
    # stats here; they are discarded by the masked output writeback.
    o_ref[...] = (x_ref[...].astype(jnp.float32) * scale + shift).astype(o_ref.dtype)


# ----------------------------------------------------------------------------
# HW-split path: stats kernel (accumulator outputs) + elementwise apply.
# Used when a single H*W row is too large for the fused tile to fit VMEM.
# ----------------------------------------------------------------------------
def _adain_stats_kernel(x_ref, w_ref, b_ref, scale_ref, shift_ref, *,
                        eps, inv_hw, hw_total, block_hw):
    k = pl.program_id(1)

    @pl.when(k == 0)
    def _():
        scale_ref[...] = jnp.zeros_like(scale_ref)   # running sum
        shift_ref[...] = jnp.zeros_like(shift_ref)   # running sum of squares

    xf = x_ref[...].astype(jnp.float32)
    # Mask lanes beyond H*W in the (possibly partial) last hw block so padding
    # garbage does not leak into the reduction.
    lane = jax.lax.broadcasted_iota(jnp.int32, xf.shape, 1)
    valid = (k * block_hw + lane) < hw_total
    xf = jnp.where(valid, xf, 0.0)
    scale_ref[...] += jnp.sum(xf, axis=-1, keepdims=True)
    shift_ref[...] += jnp.sum(xf * xf, axis=-1, keepdims=True)

    @pl.when(k == pl.num_programs(1) - 1)
    def _():
        mean = scale_ref[...] * jnp.float32(inv_hw)
        var = jnp.maximum(shift_ref[...] * jnp.float32(inv_hw) - mean * mean, 0.0)
        inv_std = jax.lax.rsqrt(var + jnp.float32(eps))
        scale = inv_std * w_ref[...]
        scale_ref[...] = scale
        shift_ref[...] = b_ref[...] - mean * scale


def _adain_apply_kernel(x_ref, scale_ref, shift_ref, o_ref):
    o_ref[...] = (x_ref[...].astype(jnp.float32) * scale_ref[...]
                  + shift_ref[...]).astype(o_ref.dtype)


def _adain_split(x2, w2, b2, out_dtype, *, eps, bc, hw, itemsize, sublane,
                 target_tile_bytes, vmem_cap, block_hw):
    rows = bc if bc <= sublane else sublane
    if block_hw is None:
        bhw = (target_tile_bytes // max(1, rows * itemsize)) // 128 * 128
        bhw = max(128, bhw)
        if hw >= 128:
            bhw = min(bhw, (hw // 128) * 128)
        else:
            bhw = hw
    else:
        bhw = block_hw
    hw_blocks = pl.cdiv(hw, bhw)
    row_blocks = pl.cdiv(bc, rows)

    tile = rows * bhw * itemsize
    tile_f32 = rows * bhw * 4
    vmem_limit = int(min(max(16 << 20, 4 * tile + 2 * tile_f32 + (4 << 20)),
                         vmem_cap))

    scale, shift = pl.pallas_call(
        functools.partial(_adain_stats_kernel, eps=eps, inv_hw=1.0 / hw,
                          hw_total=hw, block_hw=bhw),
        out_shape=(jax.ShapeDtypeStruct((bc, 1), jnp.float32),
                   jax.ShapeDtypeStruct((bc, 1), jnp.float32)),
        grid=(row_blocks, hw_blocks),
        in_specs=[
            pl.BlockSpec((rows, bhw), lambda i, k: (i, k)),
            pl.BlockSpec((rows, 1), lambda i, k: (i, 0)),
            pl.BlockSpec((rows, 1), lambda i, k: (i, 0)),
        ],
        out_specs=(pl.BlockSpec((rows, 1), lambda i, k: (i, 0)),
                   pl.BlockSpec((rows, 1), lambda i, k: (i, 0))),
        compiler_params=pltpu.CompilerParams(
            dimension_semantics=("parallel", "arbitrary"),
            vmem_limit_bytes=vmem_limit),
        cost_estimate=pl.CostEstimate(
            flops=int(4 * bc * hw), transcendentals=int(bc),
            bytes_accessed=int(bc * hw * itemsize + 16 * bc)),
    )(x2, w2, b2)

    out = pl.pallas_call(
        _adain_apply_kernel,
        out_shape=jax.ShapeDtypeStruct((bc, hw), out_dtype),
        grid=(row_blocks, hw_blocks),
        in_specs=[
            pl.BlockSpec((rows, bhw), lambda i, k: (i, k)),
            pl.BlockSpec((rows, 1), lambda i, k: (i, 0)),
            pl.BlockSpec((rows, 1), lambda i, k: (i, 0)),
        ],
        out_specs=pl.BlockSpec((rows, bhw), lambda i, k: (i, k)),
        compiler_params=pltpu.CompilerParams(
            dimension_semantics=("parallel", "parallel"),
            vmem_limit_bytes=vmem_limit),
        cost_estimate=pl.CostEstimate(
            flops=int(2 * bc * hw), transcendentals=0,
            bytes_accessed=int(2 * bc * hw * itemsize + 8 * bc)),
    )(x2, scale, shift)
    return out


# ----------------------------------------------------------------------------
# Public wrapper.
# ----------------------------------------------------------------------------
def adaptive_instance_norm_2d(x, weight, bias, *, eps=1e-5, block_rows=None,
                              block_hw=None):
    """x: (B, C, H, W); weight, bias: (B*C,). Returns (B, C, H, W)."""
    B, C, H, W = x.shape
    BC = B * C
    HW = H * W
    itemsize = jnp.dtype(x.dtype).itemsize
    sublane = {4: 8, 2: 16, 1: 32}.get(itemsize, 8)

    target_tile_bytes, vmem_cap, two_tc = _tpu_budget()

    x2 = x.reshape(BC, HW)
    w2 = weight.astype(jnp.float32).reshape(BC, 1)
    b2 = bias.astype(jnp.float32).reshape(BC, 1)

    # Split the HW axis only when even a minimal-row fused tile would not fit
    # the VMEM budget (very large spatial sizes), or when explicitly forced.
    min_rows = BC if BC <= sublane else sublane
    use_split = (block_hw is not None) or (
        _fused_vmem_estimate(min_rows, HW, itemsize) > vmem_cap)

    if use_split:
        out = _adain_split(x2, w2, b2, x.dtype, eps=eps, bc=BC, hw=HW,
                           itemsize=itemsize, sublane=sublane,
                           target_tile_bytes=target_tile_bytes,
                           vmem_cap=vmem_cap, block_hw=block_hw)
        return out.reshape(B, C, H, W)

    if block_rows is None:
        rows = _choose_block_rows(BC, HW, itemsize, sublane,
                                  target_tile_bytes, vmem_cap, two_tc)
    else:
        rows = block_rows
        assert rows == BC or rows % sublane == 0, \
            "block_rows must be sublane-aligned or equal to B*C"

    num_blocks = pl.cdiv(BC, rows)  # partial last block is fine (independent rows)
    vmem_limit = int(min(max(16 << 20, _fused_vmem_estimate(rows, HW, itemsize)),
                         vmem_cap))

    out = pl.pallas_call(
        functools.partial(_adain_fused_kernel, eps=eps, inv_hw=1.0 / HW),
        out_shape=jax.ShapeDtypeStruct((BC, HW), x.dtype),
        grid=(num_blocks,),
        in_specs=[
            pl.BlockSpec((rows, HW), lambda i: (i, 0)),
            pl.BlockSpec((rows, 1), lambda i: (i, 0)),
            pl.BlockSpec((rows, 1), lambda i: (i, 0)),
        ],
        out_specs=pl.BlockSpec((rows, HW), lambda i: (i, 0)),
        compiler_params=pltpu.CompilerParams(
            dimension_semantics=("parallel",),
            vmem_limit_bytes=vmem_limit),
        cost_estimate=pl.CostEstimate(
            flops=int(7 * BC * HW), transcendentals=int(BC),
            bytes_accessed=int(2 * BC * HW * itemsize + 8 * BC)),
    )(x2, w2, b2)
    return out.reshape(B, C, H, W)


# ----------------------------------------------------------------------------
# Pure-JAX reference (two-pass variance).
# ----------------------------------------------------------------------------
def _reference(x, weight, bias, eps=1e-5):
    B, C, H, W = x.shape
    xr = x.reshape(B * C, H * W).astype(jnp.float32)
    mean = jnp.mean(xr, axis=-1, keepdims=True)
    var = jnp.mean((xr - mean) ** 2, axis=-1, keepdims=True)
    y = (xr - mean) / jnp.sqrt(var + eps)
    y = y * weight.reshape(-1, 1) + bias.reshape(-1, 1)
    return y.reshape(B, C, H, W).astype(x.dtype)


if __name__ == "__main__":
    key = jax.random.PRNGKey(0)
    kx, kw, kb, kx2, kx3 = jax.random.split(key, 5)

    # Primary small-shape run (fused path).
    B, C, H, W = 2, 4, 16, 16
    x = jax.random.normal(kx, (B, C, H, W), dtype=jnp.float32)
    # weight / bias are normally assigned externally (e.g. by a style MLP)
    # with shape (B * num_features,); initialize deterministically here.
    weight = jax.random.normal(kw, (B * C,), dtype=jnp.float32)
    bias = jax.random.normal(kb, (B * C,), dtype=jnp.float32)

    out = jax.block_until_ready(adaptive_instance_norm_2d(x, weight, bias, eps=1e-5))
    ref = _reference(x, weight, bias, eps=1e-5)
    assert out.shape == (B, C, H, W)
    assert jnp.allclose(out, ref, atol=1e-4, rtol=1e-4), "fused path mismatch"

    # H*W not a multiple of 128 (14*14 = 196): confirms lane padding of the
    # full-extent last-dim block does not leak into the mean/var reduction.
    x14 = jax.random.normal(kx2, (2, 4, 14, 14), dtype=jnp.float32)
    out14 = jax.block_until_ready(adaptive_instance_norm_2d(x14, weight, bias, eps=1e-5))
    assert jnp.allclose(out14, _reference(x14, weight, bias, eps=1e-5),
                        atol=1e-4, rtol=1e-4), "non-128-aligned HW mismatch"

    # Force the HW-split (stats + apply) path at a small shape, including a
    # masked partial last hw block (320 = 2*128 + 64).
    xs = jax.random.normal(kx3, (2, 4, 8, 40), dtype=jnp.float32)
    outs = jax.block_until_ready(
        adaptive_instance_norm_2d(xs, weight, bias, eps=1e-5, block_hw=128))
    assert jnp.allclose(outs, _reference(xs, weight, bias, eps=1e-5),
                        atol=1e-4, rtol=1e-4), "split path mismatch"

    print("KERNEL_OK")
</pallas_src>

<mosaic_0001>
module attributes {stable_mosaic.version = 11 : i64} {
  func.func @_adain_fused_kernel(%arg0: i32, %arg1: memref<8x256xf32, #tpu.memory_space<vmem>>, %arg2: memref<8x1xf32, #tpu.memory_space<vmem>>, %arg3: memref<8x1xf32, #tpu.memory_space<vmem>>, %arg4: memref<8x256xf32, #tpu.memory_space<vmem>>) attributes {dimension_semantics = [#tpu.dimension_semantics<parallel>], iteration_bounds = array<i64: 1>, scalar_prefetch = 0 : i64, scratch_operands = 0 : i64, tpu.core_type = #tpu.core_type<tc>, window_params = [{transform_indices = @transform_0, window_bounds = array<i64: 8, 256>}, {transform_indices = @transform_1, window_bounds = array<i64: 8, 1>}, {transform_indices = @transform_2, window_bounds = array<i64: 8, 1>}, {transform_indices = @transform_3, window_bounds = array<i64: 8, 256>}]} {
    %c0 = arith.constant 0 : index
    %c0_0 = arith.constant 0 : index
    %0 = vector.load %arg1[%c0, %c0_0] : memref<8x256xf32, #tpu.memory_space<vmem>>, vector<8x256xf32>
    %cst = arith.constant dense<0.000000e+00> : vector<8xf32>
    %1 = vector.multi_reduction <add>, %0, %cst [1] : vector<8x256xf32> to vector<8xf32>
    %2 = vector.shape_cast %1 : vector<8xf32> to vector<8x1xf32>
    %3 = arith.mulf %0, %0 : vector<8x256xf32>
    %cst_1 = arith.constant dense<0.000000e+00> : vector<8xf32>
    %4 = vector.multi_reduction <add>, %3, %cst_1 [1] : vector<8x256xf32> to vector<8xf32>
    %5 = vector.shape_cast %4 : vector<8xf32> to vector<8x1xf32>
    %cst_2 = arith.constant 3.906250e-03 : f32
    %6 = vector.broadcast %cst_2 : f32 to vector<8x1xf32>
    %7 = arith.mulf %2, %6 : vector<8x1xf32>
    %cst_3 = arith.constant 3.906250e-03 : f32
    %8 = vector.broadcast %cst_3 : f32 to vector<8x1xf32>
    %9 = arith.mulf %5, %8 : vector<8x1xf32>
    %10 = arith.mulf %7, %7 : vector<8x1xf32>
    %11 = arith.subf %9, %10 : vector<8x1xf32>
    %cst_4 = arith.constant 0.000000e+00 : f32
    %12 = vector.broadcast %cst_4 : f32 to vector<8x1xf32>
    %13 = arith.maximumf %11, %12 : vector<8x1xf32>
    %cst_5 = arith.constant 9.99999974E-6 : f32
    %14 = vector.broadcast %cst_5 : f32 to vector<8x1xf32>
    %15 = arith.addf %13, %14 : vector<8x1xf32>
    %16 = math.rsqrt %15 : vector<8x1xf32>
    %c0_6 = arith.constant 0 : index
    %c0_7 = arith.constant 0 : index
    %17 = vector.load %arg2[%c0_6, %c0_7] : memref<8x1xf32, #tpu.memory_space<vmem>>, vector<8x1xf32>
    %18 = arith.mulf %16, %17 : vector<8x1xf32>
    %c0_8 = arith.constant 0 : index
    %c0_9 = arith.constant 0 : index
    %19 = vector.load %arg3[%c0_8, %c0_9] : memref<8x1xf32, #tpu.memory_space<vmem>>, vector<8x1xf32>
    %20 = arith.mulf %7, %18 : vector<8x1xf32>
    %21 = arith.subf %19, %20 : vector<8x1xf32>
    %c0_10 = arith.constant 0 : index
    %c0_11 = arith.constant 0 : index
    %22 = vector.load %arg1[%c0_10, %c0_11] : memref<8x256xf32, #tpu.memory_space<vmem>>, vector<8x256xf32>
    %23 = vector.broadcast %18 : vector<8x1xf32> to vector<8x256xf32>
    %24 = arith.mulf %22, %23 : vector<8x256xf32>
    %25 = vector.broadcast %21 : vector<8x1xf32> to vector<8x256xf32>
    %26 = arith.addf %24, %25 : vector<8x256xf32>
    %c0_12 = arith.constant 0 : index
    %c0_13 = arith.constant 0 : index
    %27 = vector.load %arg4[%c0_12, %c0_13] : memref<8x256xf32, #tpu.memory_space<vmem>>, vector<8x256xf32>
    tpu.vector_store %arg4[%c0_12, %c0_13], %26 {strides = array<i32>} : memref<8x256xf32, #tpu.memory_space<vmem>>, vector<8x256xf32>,
    return
  }
  func.func @transform_0(%arg0: i32) -> (i32, i32) {
    %c0_i32 = arith.constant 0 : i32
    %c0_i32_0 = arith.constant 0 : i32
    return %arg0, %c0_i32 : i32, i32
  }
  func.func @transform_1(%arg0: i32) -> (i32, i32) {
    %c0_i32 = arith.constant 0 : i32
    %c0_i32_0 = arith.constant 0 : i32
    return %arg0, %c0_i32 : i32, i32
  }
  func.func @transform_2(%arg0: i32) -> (i32, i32) {
    %c0_i32 = arith.constant 0 : i32
    %c0_i32_0 = arith.constant 0 : i32
    return %arg0, %c0_i32 : i32, i32
  }
  func.func @transform_3(%arg0: i32) -> (i32, i32) {
    %c0_i32 = arith.constant 0 : i32
    %c0_i32_0 = arith.constant 0 : i32
    return %arg0, %c0_i32 : i32, i32
  }
}

</mosaic_0001>

<llo_original>
// kernel: tpu_custom_call.1
$region0: #{tpu_custom_call.1}
  #allocation0 [shape = 'u32[]', space=smem, size = 0x4, offset = 0x4, fixed_abs, tag = 'smem constant byte address 0x4 - core index']
  #allocation1 [shape = 'u32[144,128]{1,0:T(1,128)}', space=vmem, size = 0x12000, scoped, tag = 'internal scratch']
  %s0 = inlined_call_operand.vmem [shape: f32[8,256], index: 0, kind: input, shape index: {}]
  %s1 = inlined_call_operand.vmem [shape: f32[8,1], index: 1, kind: input, shape index: {}]
  %s2 = inlined_call_operand.vmem [shape: f32[8,1], index: 2, kind: input, shape index: {}]
  %s3 = inlined_call_operand.hbm [shape: f32[8,256], index: 3, kind: output, shape index: {}]
  %s4 = sld [smem:[#allocation0]]
  $region22: #{tpu_custom_call.1} parent=0
    _
  %s6 = ssub.s32 1, %s4
  %s7 = scalar_select 0, %s6, %s4
  $region1: #{tpu_custom_call.1} parent=0
    #allocation2 [shape = 'u8[8192]{0}', space=vmem, size = 0x2000, scoped, tag = 'output window, operand 0, single buffered']
    #allocation3 [shape = 's32[1]{0}', space=sflag, size = 0x4, scoped, tag = 'scoped memory for tpu_custom_call.1']
    %8 = vsyncpa [#allocation3], 0
    // Predicated region
    $region2: #{tpu_custom_call.1} parent=1 // pred_check
      _
    $region3: #{tpu_custom_call.1} parent=1 // pred_check_branch
      %10 = sbr.rel (0) target = $region5
    $region4: #{tpu_custom_call.1} parent=1 // pred_region
      _
    $region5: #{tpu_custom_call.1} parent=1 // pred_fallthru
      _
    // Predicated region
    $region6: #{tpu_custom_call.1} parent=1 // pred_check
      _
    $region7: #{tpu_custom_call.1} parent=1 // pred_check_branch
      %12 = sbr.rel (0) target = $region9
    $region8: #{tpu_custom_call.1} parent=1 // pred_region
      _
    $region9: #{tpu_custom_call.1} parent=1 // pred_fallthru
      _
    // Predicated region
    $region10: #{tpu_custom_call.1} parent=1 // pred_check
      _
    $region11: #{tpu_custom_call.1} parent=1 // pred_check_branch
      %14 = sbr.rel (0) target = $region13
    $region12: #{tpu_custom_call.1} parent=1 // pred_region
      _
    $region13: #{tpu_custom_call.1} parent=1 // pred_fallthru
      _
    %v15 = vld [vmem:[%s0] sm:$0xff]
    %v16 = vld [vmem:[%s0 + $0x8] sm:$0xff]
    %v17 = vadd.f32 %v15, %v16
    %18 = vadd.xlane.f32.xlu0 %v17
    %v19 = vpop.xlane.xlu0 %18
    %v20 = vmul.f32 %v15, %v15
    %v21 = vmul.f32 %v16, %v16
    %v22 = vadd.f32 %v20, %v21
    %23 = vadd.xlane.f32.xlu0 %v22
    %v24 = vpop.xlane.xlu0 %23
    %v25 = vmul.f32 %v19, 0.00390625
    %v26 = vmul.f32 %v24, 0.00390625
    %v27 = vmul.f32 %v25, %v25
    %v28 = vsub.f32 %v26, %v27
    %v29 = vmax.f32 %v28, 0.0
    %v30 = vadd.f32 %v29, 1e-05
    %v31 = vrsqrt.pop %v30
    %v32 = vld [vmem:[%s1] sm:$0xff]
    %v33 = vmul.f32 %v31, %v32
    %v34 = vld [vmem:[%s2] sm:$0xff]
    %v35 = vmul.f32 %v25, %v33
    %v36 = vsub.f32 %v34, %v35
    %38 = vset.pattern.permute.xlu0 0
    %39 = vperm.xlu0 %38, %v33
    %v40 = vpop.permute.xlu0 %39
    %v42 = vmul.f32 %v15, %v40
    %v43 = vmul.f32 %v16, %v40
    %45 = vset.pattern.permute.xlu0 0
    %46 = vperm.xlu0 %45, %v36
    %v47 = vpop.permute.xlu0 %46
    %v49 = vadd.f32 %v42, %v47
    %v50 = vadd.f32 %v43, %v47
    %51 = vst [vmem:[#allocation2] sm:$0xff] %v49
    %52 = vst [vmem:[#allocation2 + $0x8] sm:$0xff] %v50
    // Predicated region
    $region14: #{tpu_custom_call.1} parent=1 // pred_check
      _
    $region15: #{tpu_custom_call.1} parent=1 // pred_check_branch
      %54 = sbr.rel (0) target = $region17
    $region16: #{tpu_custom_call.1} parent=1 // pred_region
      %s56 = ssub.s32 256, 256
      %57 = vsyncadd [#allocation3], %s56
      %s59 = sshll.u32 [#allocation2], 4
      %s60 = int_to_ptr.vmem [resolvable:$true] %s59
      %62 = dma.vmem_to_hbm [thread:$0]  %s60, 256, %s3, [#allocation3]
    $region17: #{tpu_custom_call.1} parent=1 // pred_fallthru
      _
    // Predicated region
    $region18: #{tpu_custom_call.1} parent=1 // pred_check
      _
    $region19: #{tpu_custom_call.1} parent=1 // pred_check_branch
      %64 = sbr.rel (0) target = $region21
    $region20: #{tpu_custom_call.1} parent=1 // pred_region
      %65 = dma.done [#allocation3], 256
    $region21: #{tpu_custom_call.1} parent=1 // pred_fallthru
      _
    %66 = vsyncpa [#allocation3], 1

</llo_original>
